<compile_context>
chip_gen: v7x
topology: tpu7x:2x2x1
jax: 0.10.0
libtpu: 0.0.40
codegen_flags: <defaults>
</compile_context>

<pallas_src>
import jax
import jax.numpy as jnp
from jax.experimental import pallas as pl
from jax.experimental.pallas import tpu as pltpu


# ------------------------------- kernels -------------------------------
def _qnet_kernel_fused(state_ref, action_ref, w1s_ref, w1a_ref, w2_ref, w3_ref,
                       b_ref, out_ref):
    """Small hidden sizes (2H <= 128): layer 2 is one block-diagonal MXU pass."""
    wdt = w1s_ref.dtype                       # f32 or bf16 (MXU input dtype)
    b = b_ref[...]                            # (3, 2H) f32
    b1 = b[0:1, :]                            # (1, 2H)
    b2 = b[1:2, :]                            # (1, 2H)
    b3 = b[2:3, 0:2]                          # (1, 2)

    s = state_ref[...].astype(wdt)            # (TB, ni)
    a = action_ref[...].astype(wdt)           # (TB, na)

    # Layer 1 (both heads at once): x @ [w1|w4] as split-K -> no [state,action] concat.
    h = (jnp.dot(s, w1s_ref[...], preferred_element_type=jnp.float32)
         + jnp.dot(a, w1a_ref[...], preferred_element_type=jnp.float32)
         + b1)
    h = jnp.maximum(h, 0.0)                   # f32 elementwise (v5e-safe)

    # Layer 2: block-diagonal (2H, 2H) keeps the two heads independent.
    h = jnp.dot(h.astype(wdt), w2_ref[...], preferred_element_type=jnp.float32) + b2
    h = jnp.maximum(h, 0.0)

    # Layer 3: (2H, 2) -> column 0 is q1, column 1 is q2 (lane-stacked output).
    out_ref[...] = (jnp.dot(h.astype(wdt), w3_ref[...],
                            preferred_element_type=jnp.float32) + b3)


def _qnet_kernel_perhead(state_ref, action_ref, w1s_ref, w1a_ref, w2_ref, w3_ref,
                         b_ref, out_ref):
    """Large hidden sizes (H % 128 == 0): per-head layer-2/3 dots, no zero blocks."""
    H = w2_ref.shape[1]
    wdt = w1s_ref.dtype
    b = b_ref[...]                            # (3, 2H) f32
    b1 = b[0:1, :]
    b2 = b[1:2, :]
    b3 = b[2:3, 0:2]

    s = state_ref[...].astype(wdt)
    a = action_ref[...].astype(wdt)

    # Layer 1 (both heads): (TB, 2H)
    h = (jnp.dot(s, w1s_ref[...], preferred_element_type=jnp.float32)
         + jnp.dot(a, w1a_ref[...], preferred_element_type=jnp.float32)
         + b1)
    h = jnp.maximum(h, 0.0)

    # Layers 2/3 per head (H is a multiple of 128, so the lane split is aligned).
    h1 = h[:, :H].astype(wdt)
    h2 = h[:, H:].astype(wdt)
    g1 = jnp.maximum(jnp.dot(h1, w2_ref[0], preferred_element_type=jnp.float32)
                     + b2[:, :H], 0.0).astype(wdt)
    g2 = jnp.maximum(jnp.dot(h2, w2_ref[1], preferred_element_type=jnp.float32)
                     + b2[:, H:], 0.0).astype(wdt)
    q1 = jnp.dot(g1, w3_ref[0], preferred_element_type=jnp.float32) + b3[:, 0:1]
    q2 = jnp.dot(g2, w3_ref[1], preferred_element_type=jnp.float32) + b3[:, 1:2]
    out_ref[...] = jnp.concatenate([q1, q2], axis=1)


# ------------------------------- wrapper -------------------------------
def qnetwork_forward(state, action, packed_params, *, tile_b=1024,
                     min_grid_steps=1, xla_fallback_max_batch=0):
    """Fused twin-Q forward. Returns (q1, q2), each (B, 1) float32.

    tile_b:                batch rows per grid step (gridless if B fits one tile).
    min_grid_steps:        set to 2 on v7x so the batch axis can shard across both
                           TensorCores; keep 1 on v5e/v6e (single TC -> gridless).
    xla_fallback_max_batch: if B <= this, skip the custom call entirely (per-step
                           RL inference is launch-latency bound); default 0 = off.
    """
    mode, w1s, w1a, w2p, w3p, b_all = packed_params
    state = state.astype(jnp.float32)
    action = action.astype(jnp.float32)

    B, ni = state.shape
    na = action.shape[1]
    H2 = b_all.shape[1]                       # 2 * hidden_dim
    H = H2 // 2

    if B <= xla_fallback_max_batch:
        return _packed_forward_jax(state, action, packed_params)

    # ----- batch tile selection (no host-side padding; partial last tile is OK) ---
    if B <= tile_b and min_grid_steps <= 1:
        tb = B                                # gridless: block == full array dim
    else:
        tb = min(tile_b, pl.cdiv(B, max(min_grid_steps, 1)))
        tb = max(8, ((tb + 7) // 8) * 8)      # sublane-aligned; OOB rows discarded
    grid = (pl.cdiv(B, tb),)

    kernel = _qnet_kernel_fused if mode == "fused" else _qnet_kernel_perhead

    if mode == "fused":
        flops = 2 * B * ((ni + na) * H2 + H2 * H2 + H2 * 2)
    else:
        flops = 2 * B * ((ni + na) * H2 + 2 * H * H + 2 * H)
    wbytes = sum(int(w.size) * w.dtype.itemsize
                 for w in (w1s, w1a, w2p, w3p, b_all))
    bytes_accessed = int((state.size + action.size + B * 2) * 4 + wbytes)

    # VMEM budget: weights + input/output tiles are double-buffered by default;
    # add room for the f32 hidden activations.  Only raise the limit when needed.
    vmem_need = 2 * (wbytes + tb * (ni + na + 2) * 4) + 3 * tb * H2 * 4
    cp_kwargs = dict(dimension_semantics=("parallel",))
    if vmem_need > 30 * 1024 * 1024:
        cp_kwargs["vmem_limit_bytes"] = int(min(vmem_need * 5 // 4,
                                                100 * 1024 * 1024))

    weight_specs = [
        pl.BlockSpec(w.shape, lambda i, n=w.ndim: (0,) * n)   # weights stay resident
        for w in (w1s, w1a, w2p, w3p, b_all)
    ]

    out = pl.pallas_call(
        kernel,
        out_shape=jax.ShapeDtypeStruct((B, 2), jnp.float32),
        grid=grid,
        in_specs=[
            pl.BlockSpec((tb, ni), lambda i: (i, 0)),          # state tile
            pl.BlockSpec((tb, na), lambda i: (i, 0)),          # action tile
            *weight_specs,
        ],
        out_specs=pl.BlockSpec((tb, 2), lambda i: (i, 0)),     # narrow lane-stacked
        compiler_params=pltpu.CompilerParams(**cp_kwargs),
        cost_estimate=pl.CostEstimate(flops=flops, transcendentals=0,
                                      bytes_accessed=bytes_accessed),
    )(state, action, w1s, w1a, w2p, w3p, b_all)

    return out[:, 0:1], out[:, 1:2]


# --------------------- pure-JAX path on packed params ---------------------
def _packed_forward_jax(state, action, packed_params):
    """Plain-XLA fallback for tiny batches (same math as the kernel)."""
    mode, w1s, w1a, w2p, w3p, b_all = packed_params
    f32 = jnp.float32
    b1, b2, b3 = b_all[0:1, :], b_all[1:2, :], b_all[2:3, 0:2]
    h = jax.nn.relu(state @ w1s.astype(f32) + action @ w1a.astype(f32) + b1)
    if mode == "fused":
        h = jax.nn.relu(h @ w2p.astype(f32) + b2)
        out = h @ w3p.astype(f32) + b3
    else:
        H = w2p.shape[1]
        g1 = jax.nn.relu(h[:, :H] @ w2p[0].astype(f32) + b2[:, :H])
        g2 = jax.nn.relu(h[:, H:] @ w2p[1].astype(f32) + b2[:, H:])
        out = jnp.concatenate([g1 @ w3p[0].astype(f32) + b3[:, 0:1],
                               g2 @ w3p[1].astype(f32) + b3[:, 1:2]], axis=1)
    return out[:, 0:1], out[:, 1:2]


# -------------------- parameter init & packing --------------------
def _xavier_uniform(key, fan_in, fan_out):
    bound = jnp.sqrt(6.0 / (fan_in + fan_out))
    # stored (in_features, out_features), i.e. transposed vs torch.nn.Linear.weight
    return jax.random.uniform(key, (fan_in, fan_out), jnp.float32, -bound, bound)


def init_qnetwork_params(key, num_inputs, num_actions, hidden_dim):
    f = num_inputs + num_actions
    dims = [(f, hidden_dim), (hidden_dim, hidden_dim), (hidden_dim, 1),
            (f, hidden_dim), (hidden_dim, hidden_dim), (hidden_dim, 1)]
    keys = jax.random.split(key, len(dims))
    params = []
    for k, (fi, fo) in zip(keys, dims):
        params.append((_xavier_uniform(k, fi, fo), jnp.zeros((1, fo), jnp.float32)))
    return params


def pack_qnetwork_params(params, num_inputs, dtype=jnp.bfloat16):
    """Pack twin-head params into fused operands (once, outside the kernel).

    dtype defaults to bf16 (MXU-native on v5e/v6e/v7x, halves weight DMA bytes);
    pass jnp.float32 for exactness.  Biases always stay f32.
    """
    (w1, b1), (w2, b2), (w3, b3), (w4, b4), (w5, b5), (w6, b6) = params
    H = w1.shape[1]

    w1c = jnp.concatenate([w1, w4], axis=1)                  # (F, 2H)
    w1s = w1c[:num_inputs]                                   # (ni, 2H)
    w1a = w1c[num_inputs:]                                   # (na, 2H)

    b1c = jnp.concatenate([b1, b4], axis=1)                  # (1, 2H)
    b2c = jnp.concatenate([b2, b5], axis=1)                  # (1, 2H)
    b3c = jnp.pad(jnp.concatenate([b3, b6], axis=1),
                  ((0, 0), (0, 2 * H - 2)))                  # (1, 2H), tail zeros
    b_all = jnp.concatenate([b1c, b2c, b3c], axis=0).astype(jnp.float32)

    if H % 128 == 0 and 2 * H > 128:
        # Production sizes: per-head stacks -> no zero-block MXU/DMA waste.
        w2p = jnp.stack([w2, w5], axis=0)                    # (2, H, H)
        w3p = jnp.stack([w3, w6], axis=0)                    # (2, H, 1)
        mode = "perhead"
    else:
        # Tiny hidden sizes: block-diagonal keeps layer 2 to a single MXU pass.
        zero = jnp.zeros((H, H), jnp.float32)
        w2p = jnp.block([[w2, zero], [zero, w5]])            # (2H, 2H)
        w3p = jnp.concatenate(
            [jnp.concatenate([w3, jnp.zeros((H, 1), jnp.float32)], axis=0),
             jnp.concatenate([jnp.zeros((H, 1), jnp.float32), w6], axis=0)],
            axis=1)                                          # (2H, 2)
        mode = "fused"

    return (mode, w1s.astype(dtype), w1a.astype(dtype), w2p.astype(dtype),
            w3p.astype(dtype), b_all)


# ---------------- pure-JAX reference (unpacked params) ----------------
def _ref_forward(state, action, params):
    x = jnp.concatenate([state, action], axis=1)
    (w1, b1), (w2, b2), (w3, b3), (w4, b4), (w5, b5), (w6, b6) = params
    h = jax.nn.relu(x @ w1 + b1)
    h = jax.nn.relu(h @ w2 + b2)
    q1 = h @ w3 + b3
    h2 = jax.nn.relu(x @ w4 + b4)
    h2 = jax.nn.relu(h2 @ w5 + b5)
    q2 = h2 @ w6 + b6
    return q1, q2


if __name__ == "__main__":
    num_inputs, num_actions, hidden_dim = 8, 4, 32
    batch = 2

    key = jax.random.PRNGKey(0)
    k_params, k_state, k_action = jax.random.split(key, 3)

    params = init_qnetwork_params(k_params, num_inputs, num_actions, hidden_dim)
    state = jax.random.normal(k_state, (batch, num_inputs), jnp.float32)
    action = jax.random.normal(k_action, (batch, num_actions), jnp.float32)

    q1_ref, q2_ref = _ref_forward(state, action, params)

    # --- f32 weights, gridless small batch (tight tolerance) ---
    packed_f32 = pack_qnetwork_params(params, num_inputs, dtype=jnp.float32)
    q1, q2 = qnetwork_forward(state, action, packed_f32)
    jax.block_until_ready((q1, q2))
    assert q1.shape == (batch, 1) and q2.shape == (batch, 1)
    assert jnp.allclose(q1, q1_ref, atol=1e-5, rtol=1e-5)
    assert jnp.allclose(q2, q2_ref, atol=1e-5, rtol=1e-5)

    # --- default bf16 weights (MXU-native on v5e/v6e/v7x; f32 accumulation) ---
    packed_bf16 = pack_qnetwork_params(params, num_inputs)
    q1b, q2b = qnetwork_forward(state, action, packed_bf16)
    jax.block_until_ready((q1b, q2b))
    assert jnp.allclose(q1b, q1_ref, atol=5e-2, rtol=5e-2)
    assert jnp.allclose(q2b, q2_ref, atol=5e-2, rtol=5e-2)

    # --- non-divisible large batch: multi-step grid, partial last tile, NO host pad
    kb1, kb2 = jax.random.split(jax.random.PRNGKey(1))
    big_b = 600
    sbig = jax.random.normal(kb1, (big_b, num_inputs), jnp.float32)
    abig = jax.random.normal(kb2, (big_b, num_actions), jnp.float32)
    q1c, q2c = qnetwork_forward(sbig, abig, packed_f32, tile_b=256)
    jax.block_until_ready((q1c, q2c))
    q1c_ref, q2c_ref = _ref_forward(sbig, abig, params)
    assert jnp.allclose(q1c, q1c_ref, atol=1e-4, rtol=1e-4)
    assert jnp.allclose(q2c, q2c_ref, atol=1e-4, rtol=1e-4)

    # --- min_grid_steps=2 (v7x two-TensorCore sharding path) ---
    q1d, q2d = qnetwork_forward(sbig, abig, packed_f32, min_grid_steps=2)
    jax.block_until_ready((q1d, q2d))
    assert jnp.allclose(q1d, q1c_ref, atol=1e-4, rtol=1e-4)
    assert jnp.allclose(q2d, q2c_ref, atol=1e-4, rtol=1e-4)

    # --- production hidden size -> per-head (2,H,H)/(2,H,1) packing path ---
    params_big = init_qnetwork_params(jax.random.PRNGKey(2), num_inputs,
                                      num_actions, 256)
    packed_ph = pack_qnetwork_params(params_big, num_inputs, dtype=jnp.float32)
    assert packed_ph[0] == "perhead"
    s64 = jax.random.normal(jax.random.PRNGKey(3), (64, num_inputs), jnp.float32)
    a64 = jax.random.normal(jax.random.PRNGKey(4), (64, num_actions), jnp.float32)
    q1e, q2e = qnetwork_forward(s64, a64, packed_ph)
    jax.block_until_ready((q1e, q2e))
    q1e_ref, q2e_ref = _ref_forward(s64, a64, params_big)
    assert jnp.allclose(q1e, q1e_ref, atol=1e-4, rtol=1e-4)
    assert jnp.allclose(q2e, q2e_ref, atol=1e-4, rtol=1e-4)

    print("KERNEL_OK")
</pallas_src>

<mosaic_0001>
module attributes {stable_mosaic.version = 11 : i64} {
  func.func @_qnet_kernel_fused(%arg0: i32, %arg1: memref<2x8xf32, #tpu.memory_space<vmem>>, %arg2: memref<2x4xf32, #tpu.memory_space<vmem>>, %arg3: memref<8x64xf32, #tpu.memory_space<vmem>>, %arg4: memref<4x64xf32, #tpu.memory_space<vmem>>, %arg5: memref<64x64xf32, #tpu.memory_space<vmem>>, %arg6: memref<64x2xf32, #tpu.memory_space<vmem>>, %arg7: memref<3x64xf32, #tpu.memory_space<vmem>>, %arg8: memref<2x2xf32, #tpu.memory_space<vmem>>) attributes {dimension_semantics = [#tpu.dimension_semantics<parallel>], iteration_bounds = array<i64: 1>, scalar_prefetch = 0 : i64, scratch_operands = 0 : i64, tpu.core_type = #tpu.core_type<tc>, window_params = [{transform_indices = @transform_0, window_bounds = array<i64: 2, 8>}, {transform_indices = @transform_1, window_bounds = array<i64: 2, 4>}, {pipeline_mode = #tpu.pipeline_mode<synchronous>, transform_indices = @transform_2, window_bounds = array<i64: 8, 64>}, {pipeline_mode = #tpu.pipeline_mode<synchronous>, transform_indices = @transform_3, window_bounds = array<i64: 4, 64>}, {pipeline_mode = #tpu.pipeline_mode<synchronous>, transform_indices = @transform_4, window_bounds = array<i64: 64, 64>}, {pipeline_mode = #tpu.pipeline_mode<synchronous>, transform_indices = @transform_5, window_bounds = array<i64: 64, 2>}, {pipeline_mode = #tpu.pipeline_mode<synchronous>, transform_indices = @transform_6, window_bounds = array<i64: 3, 64>}, {transform_indices = @transform_7, window_bounds = array<i64: 2, 2>}]} {
    %c0 = arith.constant 0 : index
    %c0_0 = arith.constant 0 : index
    %0 = vector.load %arg7[%c0, %c0_0] : memref<3x64xf32, #tpu.memory_space<vmem>>, vector<3x64xf32>
    %1 = vector.extract_strided_slice %0 {offsets = [0, 0], sizes = [1, 64], strides = [1, 1]} : vector<3x64xf32> to vector<1x64xf32>
    %2 = vector.extract_strided_slice %0 {offsets = [1, 0], sizes = [1, 64], strides = [1, 1]} : vector<3x64xf32> to vector<1x64xf32>
    %3 = vector.extract_strided_slice %0 {offsets = [2, 0], sizes = [1, 2], strides = [1, 1]} : vector<3x64xf32> to vector<1x2xf32>
    %c0_1 = arith.constant 0 : index
    %c0_2 = arith.constant 0 : index
    %4 = vector.load %arg1[%c0_1, %c0_2] : memref<2x8xf32, #tpu.memory_space<vmem>>, vector<2x8xf32>
    %c0_3 = arith.constant 0 : index
    %c0_4 = arith.constant 0 : index
    %5 = vector.load %arg2[%c0_3, %c0_4] : memref<2x4xf32, #tpu.memory_space<vmem>>, vector<2x4xf32>
    %c0_5 = arith.constant 0 : index
    %c0_6 = arith.constant 0 : index
    %6 = vector.load %arg3[%c0_5, %c0_6] : memref<8x64xf32, #tpu.memory_space<vmem>>, vector<8x64xf32>
    %cst = arith.constant dense<0.000000e+00> : vector<2x64xf32>
    %7 = tpu.matmul %4, %6, %cst {dimension_numbers = #tpu.dot_dimension_numbers<[1], [0], [0], [1], [0, 0, 1, 1], [], []>} : vector<2x8xf32>, vector<8x64xf32>, vector<2x64xf32> -> vector<2x64xf32>
    %c0_7 = arith.constant 0 : index
    %c0_8 = arith.constant 0 : index
    %8 = vector.load %arg4[%c0_7, %c0_8] : memref<4x64xf32, #tpu.memory_space<vmem>>, vector<4x64xf32>
    %cst_9 = arith.constant dense<0.000000e+00> : vector<2x64xf32>
    %9 = tpu.matmul %5, %8, %cst_9 {dimension_numbers = #tpu.dot_dimension_numbers<[1], [0], [0], [1], [0, 0, 1, 1], [], []>} : vector<2x4xf32>, vector<4x64xf32>, vector<2x64xf32> -> vector<2x64xf32>
    %10 = arith.addf %7, %9 : vector<2x64xf32>
    %11 = vector.broadcast %1 : vector<1x64xf32> to vector<2x64xf32>
    %12 = arith.addf %10, %11 : vector<2x64xf32>
    %cst_10 = arith.constant 0.000000e+00 : f32
    %13 = vector.broadcast %cst_10 : f32 to vector<2x64xf32>
    %14 = arith.maximumf %12, %13 : vector<2x64xf32>
    %c0_11 = arith.constant 0 : index
    %c0_12 = arith.constant 0 : index
    %15 = vector.load %arg5[%c0_11, %c0_12] : memref<64x64xf32, #tpu.memory_space<vmem>>, vector<64x64xf32>
    %cst_13 = arith.constant dense<0.000000e+00> : vector<2x64xf32>
    %16 = tpu.matmul %14, %15, %cst_13 {dimension_numbers = #tpu.dot_dimension_numbers<[1], [0], [0], [1], [0, 0, 1, 1], [], []>} : vector<2x64xf32>, vector<64x64xf32>, vector<2x64xf32> -> vector<2x64xf32>
    %17 = vector.broadcast %2 : vector<1x64xf32> to vector<2x64xf32>
    %18 = arith.addf %16, %17 : vector<2x64xf32>
    %cst_14 = arith.constant 0.000000e+00 : f32
    %19 = vector.broadcast %cst_14 : f32 to vector<2x64xf32>
    %20 = arith.maximumf %18, %19 : vector<2x64xf32>
    %c0_15 = arith.constant 0 : index
    %c0_16 = arith.constant 0 : index
    %21 = vector.load %arg6[%c0_15, %c0_16] : memref<64x2xf32, #tpu.memory_space<vmem>>, vector<64x2xf32>
    %cst_17 = arith.constant dense<0.000000e+00> : vector<2x2xf32>
    %22 = tpu.matmul %20, %21, %cst_17 {dimension_numbers = #tpu.dot_dimension_numbers<[1], [0], [0], [1], [0, 0, 1, 1], [], []>} : vector<2x64xf32>, vector<64x2xf32>, vector<2x2xf32> -> vector<2x2xf32>
    %23 = vector.broadcast %3 : vector<1x2xf32> to vector<2x2xf32>
    %24 = arith.addf %22, %23 : vector<2x2xf32>
    %c0_18 = arith.constant 0 : index
    %c0_19 = arith.constant 0 : index
    %25 = vector.load %arg8[%c0_18, %c0_19] : memref<2x2xf32, #tpu.memory_space<vmem>>, vector<2x2xf32>
    tpu.vector_store %arg8[%c0_18, %c0_19], %24 {strides = array<i32>} : memref<2x2xf32, #tpu.memory_space<vmem>>, vector<2x2xf32>,
    return
  }
  func.func @transform_0(%arg0: i32) -> (i32, i32) {
    %c0_i32 = arith.constant 0 : i32
    %c0_i32_0 = arith.constant 0 : i32
    return %arg0, %c0_i32 : i32, i32
  }
  func.func @transform_1(%arg0: i32) -> (i32, i32) {
    %c0_i32 = arith.constant 0 : i32
    %c0_i32_0 = arith.constant 0 : i32
    return %arg0, %c0_i32 : i32, i32
  }
  func.func @transform_2(%arg0: i32) -> (i32, i32) {
    %c0_i32 = arith.constant 0 : i32
    %c0_i32_0 = arith.constant 0 : i32
    %c0_i32_1 = arith.constant 0 : i32
    return %c0_i32, %c0_i32_0 : i32, i32
  }
  func.func @transform_3(%arg0: i32) -> (i32, i32) {
    %c0_i32 = arith.constant 0 : i32
    %c0_i32_0 = arith.constant 0 : i32
    %c0_i32_1 = arith.constant 0 : i32
    return %c0_i32, %c0_i32_0 : i32, i32
  }
  func.func @transform_4(%arg0: i32) -> (i32, i32) {
    %c0_i32 = arith.constant 0 : i32
    %c0_i32_0 = arith.constant 0 : i32
    %c0_i32_1 = arith.constant 0 : i32
    return %c0_i32, %c0_i32_0 : i32, i32
  }
  func.func @transform_5(%arg0: i32) -> (i32, i32) {
    %c0_i32 = arith.constant 0 : i32
    %c0_i32_0 = arith.constant 0 : i32
    %c0_i32_1 = arith.constant 0 : i32
    return %c0_i32, %c0_i32_0 : i32, i32
  }
  func.func @transform_6(%arg0: i32) -> (i32, i32) {
    %c0_i32 = arith.constant 0 : i32
    %c0_i32_0 = arith.constant 0 : i32
    %c0_i32_1 = arith.constant 0 : i32
    return %c0_i32, %c0_i32_0 : i32, i32
  }
  func.func @transform_7(%arg0: i32) -> (i32, i32) {
    %c0_i32 = arith.constant 0 : i32
    %c0_i32_0 = arith.constant 0 : i32
    return %arg0, %c0_i32 : i32, i32
  }
}

</mosaic_0001>

<llo_original>
// kernel: tpu_custom_call.1
$region0: #{tpu_custom_call.1}
  #allocation0 [shape = 'u32[]', space=smem, size = 0x4, offset = 0x4, fixed_abs, tag = 'smem constant byte address 0x4 - core index']
  #allocation1 [shape = 'u32[144,128]{1,0:T(1,128)}', space=vmem, size = 0x12000, scoped, tag = 'internal scratch']
  %s0 = inlined_call_operand.hbm [shape: f32[2,8], index: 0, kind: input, shape index: {}]
  %s1 = inlined_call_operand.hbm [shape: f32[2,4], index: 1, kind: input, shape index: {}]
  %s2 = inlined_call_operand.vmem [shape: f32[8,64], index: 2, kind: input, shape index: {}]
  %s3 = inlined_call_operand.vmem [shape: f32[4,64], index: 3, kind: input, shape index: {}]
  %s4 = inlined_call_operand.vmem [shape: f32[64,64], index: 4, kind: input, shape index: {}]
  %s5 = inlined_call_operand.vmem [shape: f32[64,2], index: 5, kind: input, shape index: {}]
  %s6 = inlined_call_operand.vmem [shape: f32[3,64], index: 6, kind: input, shape index: {}]
  %s7 = inlined_call_operand.hbm [shape: f32[2,2], index: 7, kind: output, shape index: {}]
  %s8 = sld [smem:[#allocation0]]
  $region46: #{tpu_custom_call.1} parent=0
    _
  %s10 = ssub.s32 1, %s8
  %s11 = scalar_select 0, %s10, %s8
  $region1: #{tpu_custom_call.1} parent=0
    #allocation2 [shape = 'u8[1024]{0}', space=vmem, size = 0x400, scoped, tag = 'input window, operand 0, single buffered']
    #allocation3 [shape = 's32[1]{0}', space=sflag, size = 0x4, scoped, tag = 'scoped memory for tpu_custom_call.1']
    #allocation4 [shape = 's32[1]{0}', space=sflag, size = 0x4, scoped, tag = 'scoped memory for tpu_custom_call.1']
    #allocation5 [shape = 'u8[1024]{0}', space=vmem, size = 0x400, scoped, tag = 'input window, operand 1, single buffered']
    #allocation6 [shape = 's32[1]{0}', space=sflag, size = 0x4, scoped, tag = 'scoped memory for tpu_custom_call.1']
    #allocation7 [shape = 'u8[1024]{0}', space=vmem, size = 0x400, scoped, tag = 'output window, operand 0, single buffered']
    %12 = vsyncpa [#allocation3], 0
    %13 = vsyncpa [#allocation6], 0
    %14 = vsyncpa [#allocation4], 0
    // Predicated region
    $region2: #{tpu_custom_call.1} parent=1 // pred_check
      _
    $region3: #{tpu_custom_call.1} parent=1 // pred_check_branch
      %16 = sbr.rel (0) target = $region5
    $region4: #{tpu_custom_call.1} parent=1 // pred_region
      %s18 = ssub.s32 32, 32
      %19 = vsyncadd [#allocation3], %s18
      %s21 = sshll.u32 [#allocation2], 4
      %s22 = int_to_ptr.vmem [resolvable:$true] %s21
      %24 = dma.hbm_to_vmem [thread:$0]  %s0, 32, %s22, [#allocation3]
    $region5: #{tpu_custom_call.1} parent=1 // pred_fallthru
      _
    // Predicated region
    $region6: #{tpu_custom_call.1} parent=1 // pred_check
      _
    $region7: #{tpu_custom_call.1} parent=1 // pred_check_branch
      %26 = sbr.rel (0) target = $region9
    $region8: #{tpu_custom_call.1} parent=1 // pred_region
      %s28 = ssub.s32 32, 32
      %29 = vsyncadd [#allocation6], %s28
      %s31 = sshll.u32 [#allocation5], 4
      %s32 = int_to_ptr.vmem [resolvable:$true] %s31
      %34 = dma.hbm_to_vmem [thread:$0]  %s1, 32, %s32, [#allocation6]
    $region9: #{tpu_custom_call.1} parent=1 // pred_fallthru
      _
    // Predicated region
    $region10: #{tpu_custom_call.1} parent=1 // pred_check
      _
    $region11: #{tpu_custom_call.1} parent=1 // pred_check_branch
      %36 = sbr.rel (0) target = $region13
    $region12: #{tpu_custom_call.1} parent=1 // pred_region
      _
    $region13: #{tpu_custom_call.1} parent=1 // pred_fallthru
      _
    // Predicated region
    $region14: #{tpu_custom_call.1} parent=1 // pred_check
      _
    $region15: #{tpu_custom_call.1} parent=1 // pred_check_branch
      %38 = sbr.rel (0) target = $region17
    $region16: #{tpu_custom_call.1} parent=1 // pred_region
      _
    $region17: #{tpu_custom_call.1} parent=1 // pred_fallthru
      _
    // Predicated region
    $region18: #{tpu_custom_call.1} parent=1 // pred_check
      _
    $region19: #{tpu_custom_call.1} parent=1 // pred_check_branch
      %40 = sbr.rel (0) target = $region21
    $region20: #{tpu_custom_call.1} parent=1 // pred_region
      _
    $region21: #{tpu_custom_call.1} parent=1 // pred_fallthru
      _
    // Predicated region
    $region22: #{tpu_custom_call.1} parent=1 // pred_check
      _
    $region23: #{tpu_custom_call.1} parent=1 // pred_check_branch
      %42 = sbr.rel (0) target = $region25
    $region24: #{tpu_custom_call.1} parent=1 // pred_region
      _
    $region25: #{tpu_custom_call.1} parent=1 // pred_fallthru
      _
    // Predicated region
    $region26: #{tpu_custom_call.1} parent=1 // pred_check
      _
    $region27: #{tpu_custom_call.1} parent=1 // pred_check_branch
      %44 = sbr.rel (0) target = $region29
    $region28: #{tpu_custom_call.1} parent=1 // pred_region
      _
    $region29: #{tpu_custom_call.1} parent=1 // pred_fallthru
      _
    // Predicated region
    $region30: #{tpu_custom_call.1} parent=1 // pred_check
      _
    $region31: #{tpu_custom_call.1} parent=1 // pred_check_branch
      %46 = sbr.rel (0) target = $region33
    $region32: #{tpu_custom_call.1} parent=1 // pred_region
      %47 = dma.done [#allocation3], 32
    $region33: #{tpu_custom_call.1} parent=1 // pred_fallthru
      _
    // Predicated region
    $region34: #{tpu_custom_call.1} parent=1 // pred_check
      _
    $region35: #{tpu_custom_call.1} parent=1 // pred_check_branch
      %49 = sbr.rel (0) target = $region37
    $region36: #{tpu_custom_call.1} parent=1 // pred_region
      %50 = dma.done [#allocation6], 32
    $region37: #{tpu_custom_call.1} parent=1 // pred_fallthru
      _
    %v51 = vld [vmem:[%s6] sm:$0x7]
    %v52 = vld [vmem:[#allocation2] sm:$0x3]
    %v53 = vld [vmem:[#allocation5] sm:$0x3]
    %v54 = vld [vmem:[%s2] sm:$0xff]
    %v55 = vld [vmem:[%s3] sm:$0xf]
    %vm56 = vcmask 31744
    %v58 = vsel %vm56, %v53, 0
    %vm60 = vcmask 1043456
    %v62 = vsel %vm60, %v55, 0
    %64 = vmatprep.subr.mxu0 0.0
    %65 = vmatpush1.msra.mxu0 %v62
    %66 = vmatprep.subr.mxu0 0.0
    %67 = vmatpush1.msra.mxu0 0.0
    %68 = vmatprep.subr.mxu0 0.0
    %69 = vmatpush1.msra.mxu0 0.0
    %70 = vmatprep.subr.mxu0 0.0
    %71 = vmatpush1.msra.mxu0 0.0
    %72 = vmatprep.subr.mxu0 0.0
    %73 = vmatpush1.msra.mxu0 0.0
    %74 = vmatprep.subr.mxu0 0.0
    %75 = vmatpush1.msra.mxu0 0.0
    %76 = vmatprep.subr.mxu0 0.0
    %77 = vmatpush1.msra.mxu0 0.0
    %78 = vmatprep.subr.mxu0 0.0
    %79 = vmatpush1.msra.mxu0 0.0
    %80 = vmatprep.subr.mxu0 0.0
    %81 = vmatpush1.msra.mxu0 0.0
    %82 = vmatprep.subr.mxu0 0.0
    %83 = vmatpush1.msra.mxu0 0.0
    %84 = vmatprep.subr.mxu0 0.0
    %85 = vmatpush1.msra.mxu0 0.0
    %86 = vmatprep.subr.mxu0 0.0
    %87 = vmatpush1.msra.mxu0 0.0
    %88 = vmatprep.subr.mxu0 0.0
    %89 = vmatpush1.msra.mxu0 0.0
    %90 = vmatprep.subr.mxu0 0.0
    %91 = vmatpush1.msra.mxu0 0.0
    %92 = vmatprep.subr.mxu0 0.0
    %93 = vmatpush1.msra.mxu0 0.0
    %94 = vmatprep.subr.mxu0 0.0
    %95 = vmatpush1.msra.mxu0 0.0
    %96 = vmatprep.subr.mxu0 0.0
    %97 = vmatpush1.msra.mxu0 0.0
    %98 = vmatprep.subr.mxu0 0.0
    %99 = vmatpush1.msra.mxu0 0.0
    %100 = vmatprep.subr.mxu0 0.0
    %101 = vmatpush1.msra.mxu0 0.0
    %102 = vmatprep.subr.mxu0 0.0
    %103 = vmatpush1.msra.mxu0 0.0
    %104 = vmatprep.subr.mxu0 0.0
    %105 = vmatpush1.msra.mxu0 0.0
    %106 = vmatprep.subr.mxu0 0.0
    %107 = vmatpush1.msra.mxu0 0.0
    %108 = vmatprep.subr.mxu0 0.0
    %109 = vmatpush1.msra.mxu0 0.0
    %110 = vmatprep.subr.mxu0 0.0
    %111 = vmatpush1.msra.mxu0 0.0
    %112 = vmatprep.subr.mxu0 0.0
    %113 = vmatpush1.msra.mxu0 0.0
    %114 = vmatprep.subr.mxu0 0.0
    %115 = vmatpush1.msra.mxu0 0.0
    %116 = vmatprep.subr.mxu0 0.0
    %117 = vmatpush1.msra.mxu0 0.0
    %118 = vmatprep.subr.mxu0 0.0
    %119 = vmatpush1.msra.mxu0 0.0
    %120 = vmatprep.subr.mxu0 0.0
    %121 = vmatpush1.msra.mxu0 0.0
    %122 = vmatprep.subr.mxu0 0.0
    %123 = vmatpush1.msra.mxu0 0.0
    %124 = vmatprep.subr.mxu0 0.0
    %125 = vmatpush1.msra.mxu0 0.0
    %126 = vmatprep.subr.mxu0 0.0
    %127 = vmatpush1.msra.mxu0 0.0
    %128 = vmatprep.mubr.f32.mxu0 0.0
    %129 = vmatmul.mubr.f32.gmra.mrb[0].mxu0 %v58
    %v130 = vpop.f32.mrb[0].mxu0
    %v131 = vadd.f32 0.0, %v130
    %v132 = vpop.f32.mrb[0].mxu0
    %133 = vdwg.mxu0
    %vm134 = vcmask 64512
    %v136 = vsel %vm134, %v52, 0
    %138 = vmatprep.subr.mxu0 0.0
    %139 = vmatpush1.msra.mxu0 %v54
    %140 = vmatprep.subr.mxu0 0.0
    %141 = vmatpush1.msra.mxu0 0.0
    %142 = vmatprep.subr.mxu0 0.0
    %143 = vmatpush1.msra.mxu0 0.0
    %144 = vmatprep.subr.mxu0 0.0
    %145 = vmatpush1.msra.mxu0 0.0
    %146 = vmatprep.subr.mxu0 0.0
    %147 = vmatpush1.msra.mxu0 0.0
    %148 = vmatprep.subr.mxu0 0.0
    %149 = vmatpush1.msra.mxu0 0.0
    %150 = vmatprep.subr.mxu0 0.0
    %151 = vmatpush1.msra.mxu0 0.0
    %152 = vmatprep.subr.mxu0 0.0
    %153 = vmatpush1.msra.mxu0 0.0
    %154 = vmatprep.subr.mxu0 0.0
    %155 = vmatpush1.msra.mxu0 0.0
    %156 = vmatprep.subr.mxu0 0.0
    %157 = vmatpush1.msra.mxu0 0.0
    %158 = vmatprep.subr.mxu0 0.0
    %159 = vmatpush1.msra.mxu0 0.0
    %160 = vmatprep.subr.mxu0 0.0
    %161 = vmatpush1.msra.mxu0 0.0
    %162 = vmatprep.subr.mxu0 0.0
    %163 = vmatpush1.msra.mxu0 0.0
    %164 = vmatprep.subr.mxu0 0.0
    %165 = vmatpush1.msra.mxu0 0.0
    %166 = vmatprep.subr.mxu0 0.0
    %167 = vmatpush1.msra.mxu0 0.0
    %168 = vmatprep.subr.mxu0 0.0
    %169 = vmatpush1.msra.mxu0 0.0
    %170 = vmatprep.subr.mxu0 0.0
    %171 = vmatpush1.msra.mxu0 0.0
    %172 = vmatprep.subr.mxu0 0.0
    %173 = vmatpush1.msra.mxu0 0.0
    %174 = vmatprep.subr.mxu0 0.0
    %175 = vmatpush1.msra.mxu0 0.0
    %176 = vmatprep.subr.mxu0 0.0
    %177 = vmatpush1.msra.mxu0 0.0
    %178 = vmatprep.subr.mxu0 0.0
    %179 = vmatpush1.msra.mxu0 0.0
    %180 = vmatprep.subr.mxu0 0.0
    %181 = vmatpush1.msra.mxu0 0.0
    %182 = vmatprep.subr.mxu0 0.0
    %183 = vmatpush1.msra.mxu0 0.0
    %184 = vmatprep.subr.mxu0 0.0
    %185 = vmatpush1.msra.mxu0 0.0
    %186 = vmatprep.subr.mxu0 0.0
    %187 = vmatpush1.msra.mxu0 0.0
    %188 = vmatprep.subr.mxu0 0.0
    %189 = vmatpush1.msra.mxu0 0.0
    %190 = vmatprep.subr.mxu0 0.0
    %191 = vmatpush1.msra.mxu0 0.0
    %192 = vmatprep.subr.mxu0 0.0
    %193 = vmatpush1.msra.mxu0 0.0
    %194 = vmatprep.subr.mxu0 0.0
    %195 = vmatpush1.msra.mxu0 0.0
    %196 = vmatprep.subr.mxu0 0.0
    %197 = vmatpush1.msra.mxu0 0.0
    %198 = vmatprep.subr.mxu0 0.0
    %199 = vmatpush1.msra.mxu0 0.0
    %200 = vmatprep.subr.mxu0 0.0
    %201 = vmatpush1.msra.mxu0 0.0
    %202 = vmatprep.mubr.f32.mxu0 0.0
    %203 = vmatmul.mubr.f32.gmra.mrb[0].mxu0 %v136
    %v204 = vpop.f32.mrb[0].mxu0
    %v205 = vadd.f32 %v131, %v204
    %v206 = vpop.f32.mrb[0].mxu0
    %207 = vdwg.mxu0
    %v208 = vlaneseq
    %v209 = vshrl.u32 %v208, 7
    %v210 = vsub.s32 0, %v209
    %v211 = vrot.slane %v51, %v210
    %v212 = vadd.f32 %v205, %v211
    %v213 = vmax.f32 %v212, 0.0
    %v214 = vld [vmem:[%s4] sm:$0xff]
    %v215 = vld [vmem:[%s4 + $0x8] sm:$0xff]
    %v216 = vld [vmem:[%s4 + $0x10] sm:$0xff]
    %v217 = vld [vmem:[%s4 + $0x18] sm:$0xff]
    %v218 = vld [vmem:[%s4 + $0x20] sm:$0xff]
    %v219 = vld [vmem:[%s4 + $0x28] sm:$0xff]
    %v220 = vld [vmem:[%s4 + $0x30] sm:$0xff]
    %v221 = vld [vmem:[%s4 + $0x38] sm:$0xff]
    %v222 = vlaneseq
    %v223 = vshrl.u32 %v222, 7
    %v224 = vsub.s32 1, %v223
    %v225 = vrot.slane %v51, %v224
    %vm226 = vcmask 523264
    %v228 = vsel %vm226, %v213, 0
    %230 = vmatprep.subr.mxu0 0.0
    %231 = vmatpush1.msra.mxu0 %v214
    %232 = vmatprep.subr.mxu0 0.0
    %233 = vmatpush1.msra.mxu0 %v215
    %234 = vmatprep.subr.mxu0 0.0
    %235 = vmatpush1.msra.mxu0 %v216
    %236 = vmatprep.subr.mxu0 0.0
    %237 = vmatpush1.msra.mxu0 %v217
    %238 = vmatprep.subr.mxu0 0.0
    %239 = vmatpush1.msra.mxu0 %v218
    %240 = vmatprep.subr.mxu0 0.0
    %241 = vmatpush1.msra.mxu0 %v219
    %242 = vmatprep.subr.mxu0 0.0
    %243 = vmatpush1.msra.mxu0 %v220
    %244 = vmatprep.subr.mxu0 0.0
    %245 = vmatpush1.msra.mxu0 %v221
    %246 = vmatprep.subr.mxu0 0.0
    %247 = vmatpush1.msra.mxu0 0.0
    %248 = vmatprep.subr.mxu0 0.0
    %249 = vmatpush1.msra.mxu0 0.0
    %250 = vmatprep.subr.mxu0 0.0
    %251 = vmatpush1.msra.mxu0 0.0
    %252 = vmatprep.subr.mxu0 0.0
    %253 = vmatpush1.msra.mxu0 0.0
    %254 = vmatprep.subr.mxu0 0.0
    %255 = vmatpush1.msra.mxu0 0.0
    %256 = vmatprep.subr.mxu0 0.0
    %257 = vmatpush1.msra.mxu0 0.0
    %258 = vmatprep.subr.mxu0 0.0
    %259 = vmatpush1.msra.mxu0 0.0
    %260 = vmatprep.subr.mxu0 0.0
    %261 = vmatpush1.msra.mxu0 0.0
    %262 = vmatprep.subr.mxu0 0.0
    %263 = vmatpush1.msra.mxu0 0.0
    %264 = vmatprep.subr.mxu0 0.0
    %265 = vmatpush1.msra.mxu0 0.0
    %266 = vmatprep.subr.mxu0 0.0
    %267 = vmatpush1.msra.mxu0 0.0
    %268 = vmatprep.subr.mxu0 0.0
    %269 = vmatpush1.msra.mxu0 0.0
    %270 = vmatprep.subr.mxu0 0.0
    %271 = vmatpush1.msra.mxu0 0.0
    %272 = vmatprep.subr.mxu0 0.0
    %273 = vmatpush1.msra.mxu0 0.0
    %274 = vmatprep.subr.mxu0 0.0
    %275 = vmatpush1.msra.mxu0 0.0
    %276 = vmatprep.subr.mxu0 0.0
    %277 = vmatpush1.msra.mxu0 0.0
    %278 = vmatprep.subr.mxu0 0.0
    %279 = vmatpush1.msra.mxu0 0.0
    %280 = vmatprep.subr.mxu0 0.0
    %281 = vmatpush1.msra.mxu0 0.0
    %282 = vmatprep.subr.mxu0 0.0
    %283 = vmatpush1.msra.mxu0 0.0
    %284 = vmatprep.subr.mxu0 0.0
    %285 = vmatpush1.msra.mxu0 0.0
    %286 = vmatprep.subr.mxu0 0.0
    %287 = vmatpush1.msra.mxu0 0.0
    %288 = vmatprep.subr.mxu0 0.0
    %289 = vmatpush1.msra.mxu0 0.0
    %290 = vmatprep.subr.mxu0 0.0
    %291 = vmatpush1.msra.mxu0 0.0
    %292 = vmatprep.subr.mxu0 0.0
    %293 = vmatpush1.msra.mxu0 0.0
    %294 = vmatprep.mubr.f32.mxu0 0.0
    %295 = vmatmul.mubr.f32.gmra.mrb[0].mxu0 %v228
    %v296 = vpop.f32.mrb[0].mxu0
    %v297 = vadd.f32 %v225, %v296
    %v298 = vpop.f32.mrb[0].mxu0
    %299 = vdwg.mxu0
    %v300 = vmax.f32 %v297, 0.0
    %v301 = vld [vmem:[%s5] sm:$0xff]
    %v302 = vld [vmem:[%s5 + $0x8] sm:$0xff]
    %v303 = vld [vmem:[%s5 + $0x10] sm:$0xff]
    %v304 = vld [vmem:[%s5 + $0x18] sm:$0xff]
    %v305 = vld [vmem:[%s5 + $0x20] sm:$0xff]
    %v306 = vld [vmem:[%s5 + $0x28] sm:$0xff]
    %v307 = vld [vmem:[%s5 + $0x30] sm:$0xff]
    %v308 = vld [vmem:[%s5 + $0x38] sm:$0xff]
    %v309 = vlaneseq
    %v310 = vshrl.u32 %v309, 7
    %v311 = vsub.s32 2, %v310
    %v312 = vrot.slane %v51, %v311
    %v314 = vsel %vm226, %v300, 0
    %316 = vmatprep.subr.mxu0 0.0
    %317 = vmatpush1.msra.mxu0 %v301
    %318 = vmatprep.subr.mxu0 0.0
    %319 = vmatpush1.msra.mxu0 %v302
    %320 = vmatprep.subr.mxu0 0.0
    %321 = vmatpush1.msra.mxu0 %v303
    %322 = vmatprep.subr.mxu0 0.0
    %323 = vmatpush1.msra.mxu0 %v304
    %324 = vmatprep.subr.mxu0 0.0
    %325 = vmatpush1.msra.mxu0 %v305
    %326 = vmatprep.subr.mxu0 0.0
    %327 = vmatpush1.msra.mxu0 %v306
    %328 = vmatprep.subr.mxu0 0.0
    %329 = vmatpush1.msra.mxu0 %v307
    %330 = vmatprep.subr.mxu0 0.0
    %331 = vmatpush1.msra.mxu0 %v308
    %332 = vmatprep.subr.mxu0 0.0
    %333 = vmatpush1.msra.mxu0 0.0
    %334 = vmatprep.subr.mxu0 0.0
    %335 = vmatpush1.msra.mxu0 0.0
    %336 = vmatprep.subr.mxu0 0.0
    %337 = vmatpush1.msra.mxu0 0.0
    %338 = vmatprep.subr.mxu0 0.0
    %339 = vmatpush1.msra.mxu0 0.0
    %340 = vmatprep.subr.mxu0 0.0
    %341 = vmatpush1.msra.mxu0 0.0
    %342 = vmatprep.subr.mxu0 0.0
    %343 = vmatpush1.msra.mxu0 0.0
    %344 = vmatprep.subr.mxu0 0.0
    %345 = vmatpush1.msra.mxu0 0.0
    %346 = vmatprep.subr.mxu0 0.0
    %347 = vmatpush1.msra.mxu0 0.0
    %348 = vmatprep.subr.mxu0 0.0
    %349 = vmatpush1.msra.mxu0 0.0
    %350 = vmatprep.subr.mxu0 0.0
    %351 = vmatpush1.msra.mxu0 0.0
    %352 = vmatprep.subr.mxu0 0.0
    %353 = vmatpush1.msra.mxu0 0.0
    %354 = vmatprep.subr.mxu0 0.0
    %355 = vmatpush1.msra.mxu0 0.0
    %356 = vmatprep.subr.mxu0 0.0
    %357 = vmatpush1.msra.mxu0 0.0
    %358 = vmatprep.subr.mxu0 0.0
    %359 = vmatpush1.msra.mxu0 0.0
    %360 = vmatprep.subr.mxu0 0.0
    %361 = vmatpush1.msra.mxu0 0.0
    %362 = vmatprep.subr.mxu0 0.0
    %363 = vmatpush1.msra.mxu0 0.0
    %364 = vmatprep.subr.mxu0 0.0
    %365 = vmatpush1.msra.mxu0 0.0
    %366 = vmatprep.subr.mxu0 0.0
    %367 = vmatpush1.msra.mxu0 0.0
    %368 = vmatprep.subr.mxu0 0.0
    %369 = vmatpush1.msra.mxu0 0.0
    %370 = vmatprep.subr.mxu0 0.0
    %371 = vmatpush1.msra.mxu0 0.0
    %372 = vmatprep.subr.mxu0 0.0
    %373 = vmatpush1.msra.mxu0 0.0
    %374 = vmatprep.subr.mxu0 0.0
    %375 = vmatpush1.msra.mxu0 0.0
    %376 = vmatprep.subr.mxu0 0.0
    %377 = vmatpush1.msra.mxu0 0.0
    %378 = vmatprep.subr.mxu0 0.0
    %379 = vmatpush1.msra.mxu0 0.0
    %380 = vmatprep.mubr.f32.mxu0 0.0
    %381 = vmatmul.mubr.f32.gmra.mrb[0].mxu0 %v314
    %v382 = vpop.f32.mrb[0].mxu0
    %v383 = vadd.f32 %v312, %v382
    %v384 = vpop.f32.mrb[0].mxu0
    %385 = vdwg.mxu0
    %vm386 = vcmask 9216
    %387 = vst.msk [vmem:[#allocation7] sm:$0x3] %vm386, %v383
    // Predicated region
    $region38: #{tpu_custom_call.1} parent=1 // pred_check
      _
    $region39: #{tpu_custom_call.1} parent=1 // pred_check_branch
      %389 = sbr.rel (0) target = $region41
    $region40: #{tpu_custom_call.1} parent=1 // pred_region
      %s391 = ssub.s32 32, 32
      %392 = vsyncadd [#allocation4], %s391
      %s394 = sshll.u32 [#allocation7], 4
      %s395 = int_to_ptr.vmem [resolvable:$true] %s394
      %397 = dma.vmem_to_hbm [thread:$0]  %s395, 32, %s7, [#allocation4]
    $region41: #{tpu_custom_call.1} parent=1 // pred_fallthru
      _
    // Predicated region
    $region42: #{tpu_custom_call.1} parent=1 // pred_check
      _
    $region43: #{tpu_custom_call.1} parent=1 // pred_check_branch
      %399 = sbr.rel (0) target = $region45
    $region44: #{tpu_custom_call.1} parent=1 // pred_region
      %400 = dma.done [#allocation4], 32
    $region45: #{tpu_custom_call.1} parent=1 // pred_fallthru
      _
    %401 = vsyncpa [#allocation3], 1
    %402 = vsyncpa [#allocation6], 1
    %403 = vsyncpa [#allocation4], 1

</llo_original>
